<compile_context>
chip_gen: v7x
topology: tpu7x:2x2x1
jax: 0.10.0
libtpu: 0.0.40
codegen_flags: <defaults>
</compile_context>

<pallas_src>
import jax
import jax.numpy as jnp
from jax import lax
from jax.experimental import pallas as pl
from jax.experimental.pallas import tpu as pltpu

IN_DIM = 381
HID_DIM = 50
OUT_DIM = 2

# lhs[m,k] . rhs[n,k] -> [m,n]  (contract last dims of both operands, "A @ B^T",
# MXU-native — no explicit transposes needed for PyTorch [out, in] weights).
_NT_DIMS = (((1,), (1,)), ((), ()))


def _round_up(a, b):
    return (a + b - 1) // b * b


def mlp_kernel(x_ref, w1_ref, b1_ref, w2_ref, b2_ref, out_ref, emb_ref):
    # x tile: [tb, IN]; w1: [HID, IN] bf16; b1: [1, HID] f32;
    # w2: [OUT, HID] bf16; b2: [1, OUT] f32.
    x = x_ref[...]
    if x.dtype != jnp.bfloat16:
        x = x.astype(jnp.bfloat16)

    # fc1: emb[b, h] = sum_i x[b, i] * w1[h, i]   -> [tb, HID], f32 accumulation.
    emb = lax.dot_general(x, w1_ref[...], _NT_DIMS, preferred_element_type=jnp.float32)
    emb = emb + b1_ref[...]
    emb_ref[...] = emb.astype(emb_ref.dtype)

    # ReLU + fc2: out[b, o] = sum_h relu(emb)[b, h] * w2[o, h]  -> [tb, OUT].
    h = jnp.maximum(emb, 0.0).astype(jnp.bfloat16)
    out = lax.dot_general(h, w2_ref[...], _NT_DIMS, preferred_element_type=jnp.float32)
    out_ref[...] = (out + b2_ref[...]).astype(out_ref.dtype)


def _choose_batch_tile(B, block_b):
    """Pick the batch tile. Block dims must be divisible by 8 or equal the array dim."""
    if B <= 256:
        return B  # single tile; block dims == array dims (always legal, no padding)
    # At least 2 grid steps (lets the "parallel" axis shard across v7x's two
    # TensorCores), 128-row aligned, capped at block_b (VMEM budget).
    return min(block_b, _round_up(pl.cdiv(B, 2), 128))


def mlp_forward(x, w1, b1, w2, b2, *, block_b=8192):
    """x: [B, IN] (f32 or bf16); w1: [HID, IN]; b1: [HID]; w2: [OUT, HID]; b2: [OUT].

    Returns (out [B, OUT], embedding [B, HID]) in x.dtype — same semantics as the
    PyTorch MLP (fc1 -> ReLU -> fc2, also returning the fc1 activations).
    Note: MXU operands are bf16 (f32 accumulation), so results are bf16-accurate.
    """
    B = x.shape[0]
    tb = _choose_batch_tile(B, block_b)
    grid = (pl.cdiv(B, tb),)
    out_dtype = x.dtype

    # Weights are tiny (~40 KB in bf16): cast once, keep VMEM-resident.
    w1c = w1.astype(jnp.bfloat16)
    w2c = w2.astype(jnp.bfloat16)
    b1c = b1.reshape(1, HID_DIM).astype(jnp.float32)
    b2c = b2.reshape(1, OUT_DIM).astype(jnp.float32)

    out, emb = pl.pallas_call(
        mlp_kernel,
        out_shape=(
            jax.ShapeDtypeStruct((B, OUT_DIM), out_dtype),
            jax.ShapeDtypeStruct((B, HID_DIM), out_dtype),
        ),
        grid=grid,
        in_specs=[
            pl.BlockSpec((tb, IN_DIM), lambda i: (i, 0)),        # x: tiled over batch
            pl.BlockSpec((HID_DIM, IN_DIM), lambda i: (0, 0)),   # w1: VMEM-resident
            pl.BlockSpec((1, HID_DIM), lambda i: (0, 0)),        # b1: VMEM-resident
            pl.BlockSpec((OUT_DIM, HID_DIM), lambda i: (0, 0)),  # w2: VMEM-resident
            pl.BlockSpec((1, OUT_DIM), lambda i: (0, 0)),        # b2: VMEM-resident
        ],
        out_specs=(
            pl.BlockSpec((tb, OUT_DIM), lambda i: (i, 0)),
            pl.BlockSpec((tb, HID_DIM), lambda i: (i, 0)),
        ),
        compiler_params=pltpu.CompilerParams(
            dimension_semantics=("parallel",),
            vmem_limit_bytes=48 * 1024 * 1024,
        ),
    )(x, w1c, b1c, w2c, b2c)
    return out, emb


def init_params(key):
    """Deterministic init matching PyTorch Linear layout ([out_features, in_features])."""
    k1, k2, k3, k4 = jax.random.split(key, 4)
    lim1 = 1.0 / jnp.sqrt(jnp.float32(IN_DIM))
    lim2 = 1.0 / jnp.sqrt(jnp.float32(HID_DIM))
    w1 = jax.random.uniform(k1, (HID_DIM, IN_DIM), jnp.float32, -lim1, lim1)
    b1 = jax.random.uniform(k2, (HID_DIM,), jnp.float32, -lim1, lim1)
    w2 = jax.random.uniform(k3, (OUT_DIM, HID_DIM), jnp.float32, -lim2, lim2)
    b2 = jax.random.uniform(k4, (OUT_DIM,), jnp.float32, -lim2, lim2)
    return w1, b1, w2, b2


def _ref(x, w1, b1, w2, b2):
    emb = x @ w1.T + b1
    out = jnp.maximum(emb, 0.0) @ w2.T + b2
    return out, emb


if __name__ == "__main__":
    key = jax.random.PRNGKey(0)
    kx, kp = jax.random.split(key)
    w1, b1, w2, b2 = init_params(kp)

    # Small single-tile case (block dims == array dims).
    B = 8
    x = jax.random.normal(kx, (B, IN_DIM), jnp.float32)
    out, embedding = mlp_forward(x, w1, b1, w2, b2)
    jax.block_until_ready((out, embedding))
    out_ref, emb_ref = _ref(x, w1, b1, w2, b2)
    assert out.shape == (B, OUT_DIM) and embedding.shape == (B, HID_DIM)
    assert jnp.allclose(out, out_ref, atol=2e-2, rtol=2e-2), "out mismatch"
    assert jnp.allclose(embedding, emb_ref, atol=2e-2, rtol=2e-2), "embedding mismatch"

    # Multi-tile case with a ragged last batch tile (exercises the cdiv grid and
    # out-of-bounds write dropping that replaced the old jnp.pad path).
    B2 = 300
    x2 = jax.random.normal(jax.random.PRNGKey(1), (B2, IN_DIM), jnp.float32)
    out2, emb2 = mlp_forward(x2, w1, b1, w2, b2)
    jax.block_until_ready((out2, emb2))
    out2_ref, emb2_ref = _ref(x2, w1, b1, w2, b2)
    assert jnp.allclose(out2, out2_ref, atol=2e-2, rtol=2e-2), "out mismatch (ragged)"
    assert jnp.allclose(emb2, emb2_ref, atol=2e-2, rtol=2e-2), "embedding mismatch (ragged)"

    print("KERNEL_OK")
</pallas_src>

<mosaic_0001>
module attributes {stable_mosaic.version = 11 : i64} {
  func.func @mlp_kernel(%arg0: i32, %arg1: memref<8x381xf32, #tpu.memory_space<vmem>>, %arg2: memref<50x381xbf16, #tpu.memory_space<vmem>>, %arg3: memref<1x50xf32, #tpu.memory_space<vmem>>, %arg4: memref<2x50xbf16, #tpu.memory_space<vmem>>, %arg5: memref<1x2xf32, #tpu.memory_space<vmem>>, %arg6: memref<8x2xf32, #tpu.memory_space<vmem>>, %arg7: memref<8x50xf32, #tpu.memory_space<vmem>>) attributes {dimension_semantics = [#tpu.dimension_semantics<parallel>], iteration_bounds = array<i64: 1>, scalar_prefetch = 0 : i64, scratch_operands = 0 : i64, tpu.core_type = #tpu.core_type<tc>, window_params = [{transform_indices = @transform_0, window_bounds = array<i64: 8, 381>}, {pipeline_mode = #tpu.pipeline_mode<synchronous>, transform_indices = @transform_1, window_bounds = array<i64: 50, 381>}, {pipeline_mode = #tpu.pipeline_mode<synchronous>, transform_indices = @transform_2, window_bounds = array<i64: 1, 50>}, {pipeline_mode = #tpu.pipeline_mode<synchronous>, transform_indices = @transform_3, window_bounds = array<i64: 2, 50>}, {pipeline_mode = #tpu.pipeline_mode<synchronous>, transform_indices = @transform_4, window_bounds = array<i64: 1, 2>}, {transform_indices = @transform_5, window_bounds = array<i64: 8, 2>}, {transform_indices = @transform_6, window_bounds = array<i64: 8, 50>}]} {
    %c0 = arith.constant 0 : index
    %c0_0 = arith.constant 0 : index
    %0 = vector.load %arg1[%c0, %c0_0] : memref<8x381xf32, #tpu.memory_space<vmem>>, vector<8x381xf32>
    %1 = arith.truncf %0 : vector<8x381xf32> to vector<8x381xbf16>
    %c0_1 = arith.constant 0 : index
    %c0_2 = arith.constant 0 : index
    %2 = vector.load %arg2[%c0_1, %c0_2] : memref<50x381xbf16, #tpu.memory_space<vmem>>, vector<50x381xbf16>
    %cst = arith.constant dense<0.000000e+00> : vector<8x50xf32>
    %3 = tpu.matmul %1, %2, %cst {dimension_numbers = #tpu.dot_dimension_numbers<[1], [1], [0], [0], [0, 0, 1, 0], [], []>} : vector<8x381xbf16>, vector<50x381xbf16>, vector<8x50xf32> -> vector<8x50xf32>
    %c0_3 = arith.constant 0 : index
    %c0_4 = arith.constant 0 : index
    %4 = vector.load %arg3[%c0_3, %c0_4] : memref<1x50xf32, #tpu.memory_space<vmem>>, vector<1x50xf32>
    %5 = vector.broadcast %4 : vector<1x50xf32> to vector<8x50xf32>
    %6 = arith.addf %3, %5 : vector<8x50xf32>
    %c0_5 = arith.constant 0 : index
    %c0_6 = arith.constant 0 : index
    %7 = vector.load %arg7[%c0_5, %c0_6] : memref<8x50xf32, #tpu.memory_space<vmem>>, vector<8x50xf32>
    tpu.vector_store %arg7[%c0_5, %c0_6], %6 {strides = array<i32>} : memref<8x50xf32, #tpu.memory_space<vmem>>, vector<8x50xf32>,
    %cst_7 = arith.constant 0.000000e+00 : f32
    %8 = vector.broadcast %cst_7 : f32 to vector<8x50xf32>
    %9 = arith.maximumf %6, %8 : vector<8x50xf32>
    %10 = arith.truncf %9 : vector<8x50xf32> to vector<8x50xbf16>
    %c0_8 = arith.constant 0 : index
    %c0_9 = arith.constant 0 : index
    %11 = vector.load %arg4[%c0_8, %c0_9] : memref<2x50xbf16, #tpu.memory_space<vmem>>, vector<2x50xbf16>
    %cst_10 = arith.constant dense<0.000000e+00> : vector<8x2xf32>
    %12 = tpu.matmul %10, %11, %cst_10 {dimension_numbers = #tpu.dot_dimension_numbers<[1], [1], [0], [0], [0, 0, 1, 0], [], []>} : vector<8x50xbf16>, vector<2x50xbf16>, vector<8x2xf32> -> vector<8x2xf32>
    %c0_11 = arith.constant 0 : index
    %c0_12 = arith.constant 0 : index
    %13 = vector.load %arg5[%c0_11, %c0_12] : memref<1x2xf32, #tpu.memory_space<vmem>>, vector<1x2xf32>
    %14 = vector.broadcast %13 : vector<1x2xf32> to vector<8x2xf32>
    %15 = arith.addf %12, %14 : vector<8x2xf32>
    %c0_13 = arith.constant 0 : index
    %c0_14 = arith.constant 0 : index
    %16 = vector.load %arg6[%c0_13, %c0_14] : memref<8x2xf32, #tpu.memory_space<vmem>>, vector<8x2xf32>
    tpu.vector_store %arg6[%c0_13, %c0_14], %15 {strides = array<i32>} : memref<8x2xf32, #tpu.memory_space<vmem>>, vector<8x2xf32>,
    return
  }
  func.func @transform_0(%arg0: i32) -> (i32, i32) {
    %c0_i32 = arith.constant 0 : i32
    %c0_i32_0 = arith.constant 0 : i32
    return %arg0, %c0_i32 : i32, i32
  }
  func.func @transform_1(%arg0: i32) -> (i32, i32) {
    %c0_i32 = arith.constant 0 : i32
    %c0_i32_0 = arith.constant 0 : i32
    %c0_i32_1 = arith.constant 0 : i32
    return %c0_i32, %c0_i32_0 : i32, i32
  }
  func.func @transform_2(%arg0: i32) -> (i32, i32) {
    %c0_i32 = arith.constant 0 : i32
    %c0_i32_0 = arith.constant 0 : i32
    %c0_i32_1 = arith.constant 0 : i32
    return %c0_i32, %c0_i32_0 : i32, i32
  }
  func.func @transform_3(%arg0: i32) -> (i32, i32) {
    %c0_i32 = arith.constant 0 : i32
    %c0_i32_0 = arith.constant 0 : i32
    %c0_i32_1 = arith.constant 0 : i32
    return %c0_i32, %c0_i32_0 : i32, i32
  }
  func.func @transform_4(%arg0: i32) -> (i32, i32) {
    %c0_i32 = arith.constant 0 : i32
    %c0_i32_0 = arith.constant 0 : i32
    %c0_i32_1 = arith.constant 0 : i32
    return %c0_i32, %c0_i32_0 : i32, i32
  }
  func.func @transform_5(%arg0: i32) -> (i32, i32) {
    %c0_i32 = arith.constant 0 : i32
    %c0_i32_0 = arith.constant 0 : i32
    return %arg0, %c0_i32 : i32, i32
  }
  func.func @transform_6(%arg0: i32) -> (i32, i32) {
    %c0_i32 = arith.constant 0 : i32
    %c0_i32_0 = arith.constant 0 : i32
    return %arg0, %c0_i32 : i32, i32
  }
}

</mosaic_0001>

<llo_original>
// kernel: tpu_custom_call.1
$region0: #{tpu_custom_call.1}
  #allocation0 [shape = 'u32[]', space=smem, size = 0x4, offset = 0x4, fixed_abs, tag = 'smem constant byte address 0x4 - core index']
  #allocation1 [shape = 'u32[144,128]{1,0:T(1,128)}', space=vmem, size = 0x12000, scoped, tag = 'internal scratch']
  %s0 = inlined_call_operand.hbm [shape: f32[8,381], index: 0, kind: input, shape index: {}]
  %s1 = inlined_call_operand.hbm [shape: bf16[50,381], index: 1, kind: input, shape index: {}]
  %s2 = inlined_call_operand.vmem [shape: f32[1,50], index: 2, kind: input, shape index: {}]
  %s3 = inlined_call_operand.vmem [shape: bf16[2,50], index: 3, kind: input, shape index: {}]
  %s4 = inlined_call_operand.vmem [shape: f32[1,2], index: 4, kind: input, shape index: {}]
  %s5 = inlined_call_operand.vmem [shape: f32[8,2], index: 5, kind: output, shape index: {0}]
  %s6 = inlined_call_operand.hbm [shape: f32[8,50], index: 6, kind: output, shape index: {1}]
  %7 = xla_tuple %s5, %s6
  %s8 = sld [smem:[#allocation0]]
  $region46: #{tpu_custom_call.1} parent=0
    _
  %s10 = ssub.s32 1, %s8
  %s11 = scalar_select 0, %s10, %s8
  $region1: #{tpu_custom_call.1} parent=0
    #allocation2 [shape = 'u8[12288]{0}', space=vmem, size = 0x3000, scoped, tag = 'input window, operand 0, single buffered']
    #allocation3 [shape = 's32[1]{0}', space=sflag, size = 0x4, scoped, tag = 'scoped memory for tpu_custom_call.1']
    #allocation4 [shape = 's32[1]{0}', space=sflag, size = 0x4, scoped, tag = 'scoped memory for tpu_custom_call.1']
    #allocation5 [shape = 'u8[43008]{0}', space=vmem, size = 0xa800, scoped, tag = 'input window, operand 1, single buffered']
    #allocation6 [shape = 's32[1]{0}', space=sflag, size = 0x4, scoped, tag = 'scoped memory for tpu_custom_call.1']
    #allocation7 [shape = 'u8[4096]{0}', space=vmem, size = 0x1000, scoped, tag = 'output window, operand 1, single buffered']
    %12 = vsyncpa [#allocation3], 0
    %13 = vsyncpa [#allocation6], 0
    %14 = vsyncpa [#allocation4], 0
    // Predicated region
    $region2: #{tpu_custom_call.1} parent=1 // pred_check
      _
    $region3: #{tpu_custom_call.1} parent=1 // pred_check_branch
      %16 = sbr.rel (0) target = $region5
    $region4: #{tpu_custom_call.1} parent=1 // pred_region
      %s18 = ssub.s32 384, 384
      %19 = vsyncadd [#allocation3], %s18
      %s21 = sshll.u32 [#allocation2], 4
      %s22 = int_to_ptr.vmem [resolvable:$true] %s21
      %24 = dma.hbm_to_vmem [thread:$0]  %s0, 384, %s22, [#allocation3]
    $region5: #{tpu_custom_call.1} parent=1 // pred_fallthru
      _
    // Predicated region
    $region6: #{tpu_custom_call.1} parent=1 // pred_check
      _
    $region7: #{tpu_custom_call.1} parent=1 // pred_check_branch
      %26 = sbr.rel (0) target = $region9
    $region8: #{tpu_custom_call.1} parent=1 // pred_region
      %s28 = ssub.s32 1344, 1344
      %29 = vsyncadd [#allocation6], %s28
      %s30 = sshll.u32 [#allocation5], 4
      %s31 = int_to_ptr.vmem [resolvable:$true] %s30
      %36 = dma.hbm_to_vmem [thread:$0]  %s1, 1344, %s31, [#allocation6], 192, 192, 12
    $region9: #{tpu_custom_call.1} parent=1 // pred_fallthru
      _
    // Predicated region
    $region10: #{tpu_custom_call.1} parent=1 // pred_check
      _
    $region11: #{tpu_custom_call.1} parent=1 // pred_check_branch
      %38 = sbr.rel (0) target = $region13
    $region12: #{tpu_custom_call.1} parent=1 // pred_region
      _
    $region13: #{tpu_custom_call.1} parent=1 // pred_fallthru
      _
    // Predicated region
    $region14: #{tpu_custom_call.1} parent=1 // pred_check
      _
    $region15: #{tpu_custom_call.1} parent=1 // pred_check_branch
      %40 = sbr.rel (0) target = $region17
    $region16: #{tpu_custom_call.1} parent=1 // pred_region
      _
    $region17: #{tpu_custom_call.1} parent=1 // pred_fallthru
      _
    // Predicated region
    $region18: #{tpu_custom_call.1} parent=1 // pred_check
      _
    $region19: #{tpu_custom_call.1} parent=1 // pred_check_branch
      %42 = sbr.rel (0) target = $region21
    $region20: #{tpu_custom_call.1} parent=1 // pred_region
      _
    $region21: #{tpu_custom_call.1} parent=1 // pred_fallthru
      _
    // Predicated region
    $region22: #{tpu_custom_call.1} parent=1 // pred_check
      _
    $region23: #{tpu_custom_call.1} parent=1 // pred_check_branch
      %44 = sbr.rel (0) target = $region25
    $region24: #{tpu_custom_call.1} parent=1 // pred_region
      %45 = dma.done [#allocation3], 384
    $region25: #{tpu_custom_call.1} parent=1 // pred_fallthru
      _
    // Predicated region
    $region26: #{tpu_custom_call.1} parent=1 // pred_check
      _
    $region27: #{tpu_custom_call.1} parent=1 // pred_check_branch
      %47 = sbr.rel (0) target = $region29
    $region28: #{tpu_custom_call.1} parent=1 // pred_region
      %48 = dma.done [#allocation6], 1344
    $region29: #{tpu_custom_call.1} parent=1 // pred_fallthru
      _
    %v50 = vld [vmem:[#allocation2] sm:$0xff]
    %v51 = vld [vmem:[#allocation2 + $0x8] sm:$0xff]
    %v52 = vld [vmem:[#allocation2 + $0x10] sm:$0xff]
    %v53 = vpack.c.bf16 %v50, %v50
    %v54 = vpack.c.bf16 %v51, %v51
    %v55 = vpack.c.bf16 %v52, %v52
    %v56 = vld [vmem:[#allocation5] sm:$0xff]
    %v57 = vld [vmem:[#allocation5 + $0x8] sm:$0xf]
    %v58 = vld [vmem:[#allocation5 + $0xc] sm:$0xff]
    %v59 = vld [vmem:[#allocation5 + $0x14] sm:$0xf]
    %v60 = vld [vmem:[#allocation5 + $0x18] sm:$0xff]
    %v61 = vld [vmem:[#allocation5 + $0x20] sm:$0xf]
    %v62 = vld [vmem:[#allocation5 + $0x24] sm:$0xff]
    %v63 = vld [vmem:[#allocation5 + $0x2c] sm:$0xf]
    %v64 = vld [vmem:[#allocation5 + $0x30] sm:$0xff]
    %v65 = vld [vmem:[#allocation5 + $0x38] sm:$0xf]
    %v66 = vld [vmem:[#allocation5 + $0x3c] sm:$0xff]
    %v67 = vld [vmem:[#allocation5 + $0x44] sm:$0xf]
    %v68 = vld [vmem:[#allocation5 + $0x48] sm:$0x11]
    %v69 = vld [vmem:[#allocation5 + $0x50] sm:$0x1]
    %v70 = vld [vmem:[%s2] sm:$0x1]
    %v72 = vlaneseq
    %v73 = vshrl.u32 %v72, 7
    %v74 = vsub.s32 0, %v73
    %v75 = vrot.slane %v70, %v74
    %v91 = vunpack.c.l.b16 %v56
    %v92 = vunpack.c.h.b16 %v56
    %v93 = vunpack.c.l.b16 %v57
    %v94 = vunpack.c.l.b16 %v58
    %v95 = vunpack.c.h.b16 %v58
    %v96 = vunpack.c.l.b16 %v59
    %v97 = vunpack.c.l.b16 %v60
    %v98 = vunpack.c.h.b16 %v60
    %v99 = vunpack.c.l.b16 %v61
    %v100 = vunpack.c.l.b16 %v62
    %v101 = vunpack.c.h.b16 %v62
    %v102 = vunpack.c.l.b16 %v63
    %v103 = vunpack.c.l.b16 %v64
    %v104 = vunpack.c.h.b16 %v64
    %v105 = vunpack.c.l.b16 %v65
    %v106 = vunpack.c.l.b16 %v66
    %v107 = vunpack.c.h.b16 %v66
    %v108 = vunpack.c.l.b16 %v67
    %v109 = vunpack.c.l.b16 %v68
    %v110 = vunpack.c.h.b16 %v68
    %v111 = vunpack.c.l.b16 %v69
    %v112 = vpack.c.b16 %v94, %v91
    %v113 = vpack.c.b16 %v95, %v92
    %v114 = vpack.c.b16 %v96, %v93
    %v115 = vpack.c.b16 %v100, %v97
    %v116 = vpack.c.b16 %v101, %v98
    %v117 = vpack.c.b16 %v102, %v99
    %v118 = vpack.c.b16 %v106, %v103
    %v119 = vpack.c.b16 %v107, %v104
    %v120 = vpack.c.b16 %v108, %v105
    %v121 = vpack.c.b16 %v109, %v109
    %v122 = vpack.c.b16 %v110, %v110
    %v123 = vpack.c.b16 %v111, %v111
    %vm132 = vcmask 1022976
    %v134 = vsel %vm132, %v55, 0
    %v137 = vsel %vm132, %v114, 0
    %v140 = vsel %vm132, %v117, 0
    %v143 = vsel %vm132, %v120, 0
    %v146 = vsel %vm132, %v123, 0
    %148 = vmatprep.subr.bf16.mxu0 %v113
    %149 = vmatpush1.bf16.xpose.msra.mxu0 %v112
    %150 = vmatprep.subr.bf16.mxu0 %v116
    %151 = vmatpush1.bf16.xpose.msra.mxu0 %v115
    %152 = vmatprep.subr.bf16.mxu0 %v119
    %153 = vmatpush1.bf16.xpose.msra.mxu0 %v118
    %154 = vmatprep.subr.bf16.mxu0 %v122
    %155 = vmatpush1.bf16.xpose.msra.mxu0 %v121
    %156 = vmatprep.subr.bf16.mxu0 0
    %157 = vmatpush1.bf16.xpose.msra.mxu0 0
    %158 = vmatprep.subr.bf16.mxu0 0
    %159 = vmatpush1.bf16.xpose.msra.mxu0 0
    %160 = vmatprep.subr.bf16.mxu0 0
    %161 = vmatpush1.bf16.xpose.msra.mxu0 0
    %162 = vmatprep.subr.bf16.mxu0 0
    %163 = vmatpush1.bf16.xpose.msra.mxu0 0
    %164 = vmatprep.subr.bf16.mxu0 0
    %165 = vmatpush1.bf16.xpose.msra.mxu0 0
    %166 = vmatprep.subr.bf16.mxu0 0
    %167 = vmatpush1.bf16.xpose.msra.mxu0 0
    %168 = vmatprep.subr.bf16.mxu0 0
    %169 = vmatpush1.bf16.xpose.msra.mxu0 0
    %170 = vmatprep.subr.bf16.mxu0 0
    %171 = vmatpush1.bf16.xpose.msra.mxu0 0
    %172 = vmatprep.subr.bf16.mxu0 0
    %173 = vmatpush1.bf16.xpose.msra.mxu0 0
    %174 = vmatprep.subr.bf16.mxu0 0
    %175 = vmatpush1.bf16.xpose.msra.mxu0 0
    %176 = vmatprep.subr.bf16.mxu0 0
    %177 = vmatpush1.bf16.xpose.msra.mxu0 0
    %178 = vmatprep.subr.bf16.mxu0 0
    %179 = vmatpush1.bf16.xpose.msra.mxu0 0
    %180 = vmatprep.mubr.bf16.mxu0 %v54
    %181 = vmatmul.mubr.bf16.gmra.mrb[0].mxu0 %v53
    %v182 = vpop.f32.mrb[0].mxu0
    %v183 = vadd.f32 %v75, %v182
    %v184 = vpop.f32.mrb[0].mxu0
    %v185 = vpop.f32.mrb[0].mxu0
    %v186 = vpop.f32.mrb[0].mxu0
    %187 = vdwg.mxu0
    %188 = vmatprep.subr.bf16.mxu0 0
    %189 = vmatpush1.bf16.xpose.msra.mxu0 %v137
    %190 = vmatprep.subr.bf16.mxu0 0
    %191 = vmatpush1.bf16.xpose.msra.mxu0 %v140
    %192 = vmatprep.subr.bf16.mxu0 0
    %193 = vmatpush1.bf16.xpose.msra.mxu0 %v143
    %194 = vmatprep.subr.bf16.mxu0 0
    %195 = vmatpush1.bf16.xpose.msra.mxu0 %v146
    %196 = vmatprep.subr.bf16.mxu0 0
    %197 = vmatpush1.bf16.xpose.msra.mxu0 0
    %198 = vmatprep.subr.bf16.mxu0 0
    %199 = vmatpush1.bf16.xpose.msra.mxu0 0
    %200 = vmatprep.subr.bf16.mxu0 0
    %201 = vmatpush1.bf16.xpose.msra.mxu0 0
    %202 = vmatprep.subr.bf16.mxu0 0
    %203 = vmatpush1.bf16.xpose.msra.mxu0 0
    %204 = vmatprep.subr.bf16.mxu0 0
    %205 = vmatpush1.bf16.xpose.msra.mxu0 0
    %206 = vmatprep.subr.bf16.mxu0 0
    %207 = vmatpush1.bf16.xpose.msra.mxu0 0
    %208 = vmatprep.subr.bf16.mxu0 0
    %209 = vmatpush1.bf16.xpose.msra.mxu0 0
    %210 = vmatprep.subr.bf16.mxu0 0
    %211 = vmatpush1.bf16.xpose.msra.mxu0 0
    %212 = vmatprep.subr.bf16.mxu0 0
    %213 = vmatpush1.bf16.xpose.msra.mxu0 0
    %214 = vmatprep.subr.bf16.mxu0 0
    %215 = vmatpush1.bf16.xpose.msra.mxu0 0
    %216 = vmatprep.subr.bf16.mxu0 0
    %217 = vmatpush1.bf16.xpose.msra.mxu0 0
    %218 = vmatprep.subr.bf16.mxu0 0
    %219 = vmatpush1.bf16.xpose.msra.mxu0 0
    %220 = vmatprep.mubr.bf16.mxu0 0
    %221 = vmatmul.mubr.bf16.gmra.mrb[0].mxu0 %v134
    %v222 = vpop.f32.mrb[0].mxu0
    %v223 = vadd.f32 %v183, %v222
    %v224 = vpop.f32.mrb[0].mxu0
    %v225 = vpop.f32.mrb[0].mxu0
    %v226 = vpop.f32.mrb[0].mxu0
    %227 = vdwg.mxu0
    %vm228 = vcmask 408576
    %229 = vst.msk [vmem:[#allocation7] sm:$0xff] %vm228, %v223
    %v230 = vmax.f32 %v223, 0.0
    %v231 = vpack.c.bf16 %v230, %v230
    %v232 = vld [vmem:[%s3] sm:$0x1]
    %v233 = vld [vmem:[%s4] sm:$0x1]
    %v235 = vlaneseq
    %v236 = vshrl.u32 %v235, 7
    %v237 = vsub.s32 0, %v236
    %v238 = vrot.slane %v233, %v237
    %v241 = vsel %vm228, %v231, 0
    %v244 = vsel %vm228, %v232, 0
    %246 = vmatprep.subr.bf16.mxu0 0
    %247 = vmatpush1.bf16.xpose.msra.mxu0 %v244
    %248 = vmatprep.subr.bf16.mxu0 0
    %249 = vmatpush1.bf16.xpose.msra.mxu0 0
    %250 = vmatprep.subr.bf16.mxu0 0
    %251 = vmatpush1.bf16.xpose.msra.mxu0 0
    %252 = vmatprep.subr.bf16.mxu0 0
    %253 = vmatpush1.bf16.xpose.msra.mxu0 0
    %254 = vmatprep.subr.bf16.mxu0 0
    %255 = vmatpush1.bf16.xpose.msra.mxu0 0
    %256 = vmatprep.subr.bf16.mxu0 0
    %257 = vmatpush1.bf16.xpose.msra.mxu0 0
    %258 = vmatprep.subr.bf16.mxu0 0
    %259 = vmatpush1.bf16.xpose.msra.mxu0 0
    %260 = vmatprep.subr.bf16.mxu0 0
    %261 = vmatpush1.bf16.xpose.msra.mxu0 0
    %262 = vmatprep.subr.bf16.mxu0 0
    %263 = vmatpush1.bf16.xpose.msra.mxu0 0
    %264 = vmatprep.subr.bf16.mxu0 0
    %265 = vmatpush1.bf16.xpose.msra.mxu0 0
    %266 = vmatprep.subr.bf16.mxu0 0
    %267 = vmatpush1.bf16.xpose.msra.mxu0 0
    %268 = vmatprep.subr.bf16.mxu0 0
    %269 = vmatpush1.bf16.xpose.msra.mxu0 0
    %270 = vmatprep.subr.bf16.mxu0 0
    %271 = vmatpush1.bf16.xpose.msra.mxu0 0
    %272 = vmatprep.subr.bf16.mxu0 0
    %273 = vmatpush1.bf16.xpose.msra.mxu0 0
    %274 = vmatprep.subr.bf16.mxu0 0
    %275 = vmatpush1.bf16.xpose.msra.mxu0 0
    %276 = vmatprep.subr.bf16.mxu0 0
    %277 = vmatpush1.bf16.xpose.msra.mxu0 0
    %278 = vmatprep.mubr.bf16.mxu0 0
    %279 = vmatmul.mubr.bf16.gmra.mrb[0].mxu0 %v241
    %v280 = vpop.f32.mrb[0].mxu0
    %v281 = vadd.f32 %v238, %v280
    %v282 = vpop.f32.mrb[0].mxu0
    %v283 = vpop.f32.mrb[0].mxu0
    %v284 = vpop.f32.mrb[0].mxu0
    %285 = vdwg.mxu0
    %vm286 = vcmask 15360
    %287 = vst.msk [vmem:[%s5] sm:$0xff] %vm286, %v281
    // Predicated region
    $region30: #{tpu_custom_call.1} parent=1 // pred_check
      _
    $region31: #{tpu_custom_call.1} parent=1 // pred_check_branch
      %289 = sbr.rel (0) target = $region33
    $region32: #{tpu_custom_call.1} parent=1 // pred_region
      _
    $region33: #{tpu_custom_call.1} parent=1 // pred_fallthru
      _
    // Predicated region
    $region34: #{tpu_custom_call.1} parent=1 // pred_check
      _
    $region35: #{tpu_custom_call.1} parent=1 // pred_check_branch
      %291 = sbr.rel (0) target = $region37
    $region36: #{tpu_custom_call.1} parent=1 // pred_region
      %s293 = ssub.s32 128, 128
      %294 = vsyncadd [#allocation4], %s293
      %s296 = sshll.u32 [#allocation7], 4
      %s297 = int_to_ptr.vmem [resolvable:$true] %s296
      %299 = dma.vmem_to_hbm [thread:$0]  %s297, 128, %s6, [#allocation4]
    $region37: #{tpu_custom_call.1} parent=1 // pred_fallthru
      _
    // Predicated region
    $region38: #{tpu_custom_call.1} parent=1 // pred_check
      _
    $region39: #{tpu_custom_call.1} parent=1 // pred_check_branch
      %301 = sbr.rel (0) target = $region41
    $region40: #{tpu_custom_call.1} parent=1 // pred_region
      _
    $region41: #{tpu_custom_call.1} parent=1 // pred_fallthru
      _
    // Predicated region
    $region42: #{tpu_custom_call.1} parent=1 // pred_check
      _
    $region43: #{tpu_custom_call.1} parent=1 // pred_check_branch
      %303 = sbr.rel (0) target = $region45
    $region44: #{tpu_custom_call.1} parent=1 // pred_region
      %304 = dma.done [#allocation4], 128
    $region45: #{tpu_custom_call.1} parent=1 // pred_fallthru
      _
    %305 = vsyncpa [#allocation3], 1
    %306 = vsyncpa [#allocation6], 1
    %307 = vsyncpa [#allocation4], 1

</llo_original>
